<compile_context>
chip_gen: v7x
topology: tpu7x:2x2x1
jax: 0.10.0
libtpu: 0.0.40
codegen_flags: <defaults>
</compile_context>

<pallas_src>
import math

import jax
import jax.numpy as jnp
from jax.experimental import pallas as pl
from jax.experimental.pallas import tpu as pltpu


def _round_up(x, m):
    return ((x + m - 1) // m) * m


def _cdiv(a, b):
    return (a + b - 1) // b


# ---------------------------------------------------------------------------
# Kernel: one batch tile through the whole MLP.
#   x tile arrives f32 (TB, state_dim), cast to bf16 in vregs; weights are VMEM-resident bf16,
#   biases f32.  Matmuls accumulate in f32 on the MXU, bias-add/ReLU on the VPU, tanh on EUP.
# ---------------------------------------------------------------------------
def actor_kernel(x_ref,
                 w1_ref, b1_ref,
                 w2_ref, b2_ref,
                 w3_ref, b3_ref,
                 w4_ref, b4_ref,
                 out_ref):
    x = x_ref[...].astype(jnp.bfloat16)

    h = jnp.dot(x, w1_ref[...], preferred_element_type=jnp.float32) + b1_ref[...]
    h = jnp.maximum(h, 0.0).astype(jnp.bfloat16)

    h = jnp.dot(h, w2_ref[...], preferred_element_type=jnp.float32) + b2_ref[...]
    h = jnp.maximum(h, 0.0).astype(jnp.bfloat16)

    h = jnp.dot(h, w3_ref[...], preferred_element_type=jnp.float32) + b3_ref[...]
    h = jnp.maximum(h, 0.0).astype(jnp.bfloat16)

    h = jnp.dot(h, w4_ref[...], preferred_element_type=jnp.float32) + b4_ref[...]
    out_ref[...] = jnp.tanh(h).astype(out_ref.dtype)  # f32 tanh -> |out| <= 1


def _pad2(a, rows, cols, dtype):
    a = a.astype(dtype)
    return jnp.pad(a, ((0, rows - a.shape[0]), (0, cols - a.shape[1])))


def prepare_actor_params(params, *, lane_multiple=128):
    """Cast weights to bf16 and zero-pad every layer dim to a lane multiple.

    Call ONCE (and whenever weights change) and reuse across forwards — this hoists the
    convert/pad HBM traffic out of the per-call path.  On v6e/v7x prefer lane_multiple=256
    for hidden dims if the extra padding is acceptable.
    Weights are stored as [in_features, out_features] (transposed vs. PyTorch) so the kernel
    computes y = x @ W + b directly.
    """
    state_dim, h1 = params["w1"].shape
    h2 = params["w2"].shape[1]
    h3 = params["w3"].shape[1]
    action_dim = params["w4"].shape[1]

    h1p = _round_up(h1, lane_multiple)
    h2p = _round_up(h2, lane_multiple)
    h3p = _round_up(h3, lane_multiple)
    n_pad = _round_up(action_dim, lane_multiple)

    return {
        "state_dim": state_dim,
        "action_dim": action_dim,
        "n_pad": n_pad,
        "w1": _pad2(params["w1"], state_dim, h1p, jnp.bfloat16),
        "b1": _pad2(params["b1"], 1, h1p, jnp.float32),
        "w2": _pad2(params["w2"], h1p, h2p, jnp.bfloat16),
        "b2": _pad2(params["b2"], 1, h2p, jnp.float32),
        "w3": _pad2(params["w3"], h2p, h3p, jnp.bfloat16),
        "b3": _pad2(params["b3"], 1, h3p, jnp.float32),
        "w4": _pad2(params["w4"], h3p, n_pad, jnp.bfloat16),
        "b4": _pad2(params["b4"], 1, n_pad, jnp.float32),
    }


def _choose_tiling(B, tile_b):
    """Pick (TB, B_pad, n_steps): TB a multiple of 16, tail waste bounded by ~16*n_steps rows,
    and >= 2 grid steps when B >= 32 so the 'parallel' axis can shard across v7x's 2 TCs."""
    n_steps = _cdiv(B, tile_b)
    if B >= 32:
        n_steps = max(n_steps, 2)
    TB = _round_up(_cdiv(B, n_steps), 16)
    n_steps = _cdiv(B, TB)            # drop any step that became pure padding after rounding
    B_pad = n_steps * TB
    return TB, B_pad, n_steps


def actor_forward(x, prepped, *, tile_b=512):
    """x: [B, state_dim] float32.  prepped: output of prepare_actor_params (call it once)."""
    B, state_dim = x.shape
    assert state_dim == prepped["state_dim"]
    action_dim = prepped["action_dim"]
    n_pad = prepped["n_pad"]

    TB, B_pad, n_steps = _choose_tiling(B, tile_b)

    # Only a row-pad (no cast, no lane pad); a no-op when B is already a tile multiple.
    xp = x if B_pad == B else jnp.pad(x, ((0, B_pad - B), (0, 0)))

    def resident(arr):
        # Whole array, same block every grid step -> stays VMEM-resident across the pipeline.
        # TODO(synk): on v7x with large hidden dims, mark these pipeline_mode=pl.Buffered(1)
        # to single-buffer the resident weights and free VMEM for a bigger TB.
        return pl.BlockSpec(arr.shape, lambda i: (0, 0))

    out = pl.pallas_call(
        actor_kernel,
        out_shape=jax.ShapeDtypeStruct((B_pad, n_pad), jnp.float32),
        grid=(n_steps,),
        in_specs=[
            pl.BlockSpec((TB, state_dim), lambda i: (i, 0)),   # f32 x tile, pipelined
            resident(prepped["w1"]), resident(prepped["b1"]),
            resident(prepped["w2"]), resident(prepped["b2"]),
            resident(prepped["w3"]), resident(prepped["b3"]),
            resident(prepped["w4"]), resident(prepped["b4"]),
        ],
        out_specs=pl.BlockSpec((TB, n_pad), lambda i: (i, 0)),  # lane-dense (n_pad % 128 == 0)
        compiler_params=pltpu.CompilerParams(
            dimension_semantics=("parallel",),
        ),
    )(xp,
      prepped["w1"], prepped["b1"],
      prepped["w2"], prepped["b2"],
      prepped["w3"], prepped["b3"],
      prepped["w4"], prepped["b4"])

    return out[:B, :action_dim]


def actor_ref(x, params):
    """Pure-JAX reference mimicking the kernel's bf16-input / f32-accumulate math."""
    def dot(a, w):
        return jnp.dot(a.astype(jnp.bfloat16), w.astype(jnp.bfloat16),
                       preferred_element_type=jnp.float32)
    h = jnp.maximum(dot(x, params["w1"]) + params["b1"], 0.0)
    h = jnp.maximum(dot(h, params["w2"]) + params["b2"], 0.0)
    h = jnp.maximum(dot(h, params["w3"]) + params["b3"], 0.0)
    return jnp.tanh(dot(h, params["w4"]) + params["b4"])


def init_actor_params(key, state_dim, action_dim, hidden_dim=256):
    """Deterministic init mirroring Actor.reset_parameters + nn.Linear bias default."""
    dims = [(state_dim, hidden_dim),
            (hidden_dim, hidden_dim),
            (hidden_dim, hidden_dim // 2),
            (hidden_dim // 2, action_dim)]
    params = {}
    keys = jax.random.split(key, 8)
    # fc1..fc3: kaiming_normal_(fan_in, relu) -> std = sqrt(2 / fan_in)
    for i, (fan_in, fan_out) in enumerate(dims[:3]):
        std = math.sqrt(2.0 / fan_in)
        w = std * jax.random.normal(keys[2 * i], (fan_in, fan_out), jnp.float32)
        bound = 1.0 / math.sqrt(fan_in)
        b = jax.random.uniform(keys[2 * i + 1], (1, fan_out), jnp.float32, -bound, bound)
        params[f"w{i + 1}"] = w
        params[f"b{i + 1}"] = b
    # fc4: uniform_(-0.003, 0.003) for weight, default bias init
    fan_in, fan_out = dims[3]
    params["w4"] = jax.random.uniform(keys[6], (fan_in, fan_out), jnp.float32, -0.003, 0.003)
    bound = 1.0 / math.sqrt(fan_in)
    params["b4"] = jax.random.uniform(keys[7], (1, fan_out), jnp.float32, -bound, bound)
    return params


if __name__ == "__main__":
    # Small shapes consistent with the module's forward: x: [batch, state_dim]
    state_dim, action_dim, hidden_dim = 16, 4, 32

    key = jax.random.PRNGKey(0)
    k_params, k_x1, k_x2 = jax.random.split(key, 3)
    params = init_actor_params(k_params, state_dim, action_dim, hidden_dim)

    # Hoisted weight prep: done once, reused for every forward call.
    prepped = prepare_actor_params(params)

    # Case 1: tiny batch (single grid step).
    x1 = jax.random.normal(k_x1, (8, state_dim), jnp.float32)
    out1 = jax.block_until_ready(actor_forward(x1, prepped))
    ref1 = jax.block_until_ready(actor_ref(x1, params))
    assert out1.shape == (8, action_dim)
    assert bool(jnp.all(jnp.abs(out1) <= 1.0))
    assert bool(jnp.allclose(out1, ref1, atol=1e-3, rtol=1e-3))

    # Case 2: non-tile-multiple batch exercising the >=2-step grid and row-pad tail path.
    x2 = jax.random.normal(k_x2, (40, state_dim), jnp.float32)
    out2 = jax.block_until_ready(actor_forward(x2, prepped))
    ref2 = jax.block_until_ready(actor_ref(x2, params))
    assert out2.shape == (40, action_dim)
    assert bool(jnp.all(jnp.abs(out2) <= 1.0))
    assert bool(jnp.allclose(out2, ref2, atol=1e-3, rtol=1e-3))

    print("KERNEL_OK")
</pallas_src>

<mosaic_0001>
module attributes {stable_mosaic.version = 11 : i64} {
  func.func @actor_kernel(%arg0: i32, %arg1: memref<16x16xf32, #tpu.memory_space<vmem>>, %arg2: memref<16x128xbf16, #tpu.memory_space<vmem>>, %arg3: memref<1x128xf32, #tpu.memory_space<vmem>>, %arg4: memref<128x128xbf16, #tpu.memory_space<vmem>>, %arg5: memref<1x128xf32, #tpu.memory_space<vmem>>, %arg6: memref<128x128xbf16, #tpu.memory_space<vmem>>, %arg7: memref<1x128xf32, #tpu.memory_space<vmem>>, %arg8: memref<128x128xbf16, #tpu.memory_space<vmem>>, %arg9: memref<1x128xf32, #tpu.memory_space<vmem>>, %arg10: memref<16x128xf32, #tpu.memory_space<vmem>>) attributes {dimension_semantics = [#tpu.dimension_semantics<parallel>], iteration_bounds = array<i64: 1>, scalar_prefetch = 0 : i64, scratch_operands = 0 : i64, tpu.core_type = #tpu.core_type<tc>, window_params = [{transform_indices = @transform_0, window_bounds = array<i64: 16, 16>}, {pipeline_mode = #tpu.pipeline_mode<synchronous>, transform_indices = @transform_1, window_bounds = array<i64: 16, 128>}, {pipeline_mode = #tpu.pipeline_mode<synchronous>, transform_indices = @transform_2, window_bounds = array<i64: 1, 128>}, {pipeline_mode = #tpu.pipeline_mode<synchronous>, transform_indices = @transform_3, window_bounds = array<i64: 128, 128>}, {pipeline_mode = #tpu.pipeline_mode<synchronous>, transform_indices = @transform_4, window_bounds = array<i64: 1, 128>}, {pipeline_mode = #tpu.pipeline_mode<synchronous>, transform_indices = @transform_5, window_bounds = array<i64: 128, 128>}, {pipeline_mode = #tpu.pipeline_mode<synchronous>, transform_indices = @transform_6, window_bounds = array<i64: 1, 128>}, {pipeline_mode = #tpu.pipeline_mode<synchronous>, transform_indices = @transform_7, window_bounds = array<i64: 128, 128>}, {pipeline_mode = #tpu.pipeline_mode<synchronous>, transform_indices = @transform_8, window_bounds = array<i64: 1, 128>}, {transform_indices = @transform_9, window_bounds = array<i64: 16, 128>}]} {
    %c0 = arith.constant 0 : index
    %c0_0 = arith.constant 0 : index
    %0 = vector.load %arg1[%c0, %c0_0] : memref<16x16xf32, #tpu.memory_space<vmem>>, vector<16x16xf32>
    %1 = arith.truncf %0 : vector<16x16xf32> to vector<16x16xbf16>
    %c0_1 = arith.constant 0 : index
    %c0_2 = arith.constant 0 : index
    %2 = vector.load %arg2[%c0_1, %c0_2] : memref<16x128xbf16, #tpu.memory_space<vmem>>, vector<16x128xbf16>
    %cst = arith.constant dense<0.000000e+00> : vector<16x128xf32>
    %3 = tpu.matmul %1, %2, %cst {dimension_numbers = #tpu.dot_dimension_numbers<[1], [0], [0], [1], [0, 0, 1, 1], [], []>} : vector<16x16xbf16>, vector<16x128xbf16>, vector<16x128xf32> -> vector<16x128xf32>
    %c0_3 = arith.constant 0 : index
    %c0_4 = arith.constant 0 : index
    %4 = vector.load %arg3[%c0_3, %c0_4] : memref<1x128xf32, #tpu.memory_space<vmem>>, vector<1x128xf32>
    %5 = vector.broadcast %4 : vector<1x128xf32> to vector<16x128xf32>
    %6 = arith.addf %3, %5 : vector<16x128xf32>
    %cst_5 = arith.constant 0.000000e+00 : f32
    %7 = vector.broadcast %cst_5 : f32 to vector<16x128xf32>
    %8 = arith.maximumf %6, %7 : vector<16x128xf32>
    %9 = arith.truncf %8 : vector<16x128xf32> to vector<16x128xbf16>
    %c0_6 = arith.constant 0 : index
    %c0_7 = arith.constant 0 : index
    %10 = vector.load %arg4[%c0_6, %c0_7] : memref<128x128xbf16, #tpu.memory_space<vmem>>, vector<128x128xbf16>
    %cst_8 = arith.constant dense<0.000000e+00> : vector<16x128xf32>
    %11 = tpu.matmul %9, %10, %cst_8 {dimension_numbers = #tpu.dot_dimension_numbers<[1], [0], [0], [1], [0, 0, 1, 1], [], []>} : vector<16x128xbf16>, vector<128x128xbf16>, vector<16x128xf32> -> vector<16x128xf32>
    %c0_9 = arith.constant 0 : index
    %c0_10 = arith.constant 0 : index
    %12 = vector.load %arg5[%c0_9, %c0_10] : memref<1x128xf32, #tpu.memory_space<vmem>>, vector<1x128xf32>
    %13 = vector.broadcast %12 : vector<1x128xf32> to vector<16x128xf32>
    %14 = arith.addf %11, %13 : vector<16x128xf32>
    %cst_11 = arith.constant 0.000000e+00 : f32
    %15 = vector.broadcast %cst_11 : f32 to vector<16x128xf32>
    %16 = arith.maximumf %14, %15 : vector<16x128xf32>
    %17 = arith.truncf %16 : vector<16x128xf32> to vector<16x128xbf16>
    %c0_12 = arith.constant 0 : index
    %c0_13 = arith.constant 0 : index
    %18 = vector.load %arg6[%c0_12, %c0_13] : memref<128x128xbf16, #tpu.memory_space<vmem>>, vector<128x128xbf16>
    %cst_14 = arith.constant dense<0.000000e+00> : vector<16x128xf32>
    %19 = tpu.matmul %17, %18, %cst_14 {dimension_numbers = #tpu.dot_dimension_numbers<[1], [0], [0], [1], [0, 0, 1, 1], [], []>} : vector<16x128xbf16>, vector<128x128xbf16>, vector<16x128xf32> -> vector<16x128xf32>
    %c0_15 = arith.constant 0 : index
    %c0_16 = arith.constant 0 : index
    %20 = vector.load %arg7[%c0_15, %c0_16] : memref<1x128xf32, #tpu.memory_space<vmem>>, vector<1x128xf32>
    %21 = vector.broadcast %20 : vector<1x128xf32> to vector<16x128xf32>
    %22 = arith.addf %19, %21 : vector<16x128xf32>
    %cst_17 = arith.constant 0.000000e+00 : f32
    %23 = vector.broadcast %cst_17 : f32 to vector<16x128xf32>
    %24 = arith.maximumf %22, %23 : vector<16x128xf32>
    %25 = arith.truncf %24 : vector<16x128xf32> to vector<16x128xbf16>
    %c0_18 = arith.constant 0 : index
    %c0_19 = arith.constant 0 : index
    %26 = vector.load %arg8[%c0_18, %c0_19] : memref<128x128xbf16, #tpu.memory_space<vmem>>, vector<128x128xbf16>
    %cst_20 = arith.constant dense<0.000000e+00> : vector<16x128xf32>
    %27 = tpu.matmul %25, %26, %cst_20 {dimension_numbers = #tpu.dot_dimension_numbers<[1], [0], [0], [1], [0, 0, 1, 1], [], []>} : vector<16x128xbf16>, vector<128x128xbf16>, vector<16x128xf32> -> vector<16x128xf32>
    %c0_21 = arith.constant 0 : index
    %c0_22 = arith.constant 0 : index
    %28 = vector.load %arg9[%c0_21, %c0_22] : memref<1x128xf32, #tpu.memory_space<vmem>>, vector<1x128xf32>
    %29 = vector.broadcast %28 : vector<1x128xf32> to vector<16x128xf32>
    %30 = arith.addf %27, %29 : vector<16x128xf32>
    %31 = math.tanh %30 : vector<16x128xf32>
    %c0_23 = arith.constant 0 : index
    %c0_24 = arith.constant 0 : index
    %32 = vector.load %arg10[%c0_23, %c0_24] : memref<16x128xf32, #tpu.memory_space<vmem>>, vector<16x128xf32>
    tpu.vector_store %arg10[%c0_23, %c0_24], %31 {strides = array<i32>} : memref<16x128xf32, #tpu.memory_space<vmem>>, vector<16x128xf32>,
    return
  }
  func.func @transform_0(%arg0: i32) -> (i32, i32) {
    %c0_i32 = arith.constant 0 : i32
    %c0_i32_0 = arith.constant 0 : i32
    return %arg0, %c0_i32 : i32, i32
  }
  func.func @transform_1(%arg0: i32) -> (i32, i32) {
    %c0_i32 = arith.constant 0 : i32
    %c0_i32_0 = arith.constant 0 : i32
    %c0_i32_1 = arith.constant 0 : i32
    return %c0_i32, %c0_i32_0 : i32, i32
  }
  func.func @transform_2(%arg0: i32) -> (i32, i32) {
    %c0_i32 = arith.constant 0 : i32
    %c0_i32_0 = arith.constant 0 : i32
    %c0_i32_1 = arith.constant 0 : i32
    return %c0_i32, %c0_i32_0 : i32, i32
  }
  func.func @transform_3(%arg0: i32) -> (i32, i32) {
    %c0_i32 = arith.constant 0 : i32
    %c0_i32_0 = arith.constant 0 : i32
    %c0_i32_1 = arith.constant 0 : i32
    return %c0_i32, %c0_i32_0 : i32, i32
  }
  func.func @transform_4(%arg0: i32) -> (i32, i32) {
    %c0_i32 = arith.constant 0 : i32
    %c0_i32_0 = arith.constant 0 : i32
    %c0_i32_1 = arith.constant 0 : i32
    return %c0_i32, %c0_i32_0 : i32, i32
  }
  func.func @transform_5(%arg0: i32) -> (i32, i32) {
    %c0_i32 = arith.constant 0 : i32
    %c0_i32_0 = arith.constant 0 : i32
    %c0_i32_1 = arith.constant 0 : i32
    return %c0_i32, %c0_i32_0 : i32, i32
  }
  func.func @transform_6(%arg0: i32) -> (i32, i32) {
    %c0_i32 = arith.constant 0 : i32
    %c0_i32_0 = arith.constant 0 : i32
    %c0_i32_1 = arith.constant 0 : i32
    return %c0_i32, %c0_i32_0 : i32, i32
  }
  func.func @transform_7(%arg0: i32) -> (i32, i32) {
    %c0_i32 = arith.constant 0 : i32
    %c0_i32_0 = arith.constant 0 : i32
    %c0_i32_1 = arith.constant 0 : i32
    return %c0_i32, %c0_i32_0 : i32, i32
  }
  func.func @transform_8(%arg0: i32) -> (i32, i32) {
    %c0_i32 = arith.constant 0 : i32
    %c0_i32_0 = arith.constant 0 : i32
    %c0_i32_1 = arith.constant 0 : i32
    return %c0_i32, %c0_i32_0 : i32, i32
  }
  func.func @transform_9(%arg0: i32) -> (i32, i32) {
    %c0_i32 = arith.constant 0 : i32
    %c0_i32_0 = arith.constant 0 : i32
    return %arg0, %c0_i32 : i32, i32
  }
}

</mosaic_0001>

<llo_original>
// kernel: tpu_custom_call.1
$region0: #{tpu_custom_call.1}
  #allocation0 [shape = 'u32[]', space=smem, size = 0x4, offset = 0x4, fixed_abs, tag = 'smem constant byte address 0x4 - core index']
  #allocation1 [shape = 'u32[144,128]{1,0:T(1,128)}', space=vmem, size = 0x12000, scoped, tag = 'internal scratch']
  %s0 = inlined_call_operand.hbm [shape: f32[16,16], index: 0, kind: input, shape index: {}]
  %s1 = inlined_call_operand.hbm [shape: bf16[16,128], index: 1, kind: input, shape index: {}]
  %s2 = inlined_call_operand.vmem [shape: f32[1,128], index: 2, kind: input, shape index: {}]
  %s3 = inlined_call_operand.hbm [shape: bf16[128,128], index: 3, kind: input, shape index: {}]
  %s4 = inlined_call_operand.vmem [shape: f32[1,128], index: 4, kind: input, shape index: {}]
  %s5 = inlined_call_operand.hbm [shape: bf16[128,128], index: 5, kind: input, shape index: {}]
  %s6 = inlined_call_operand.vmem [shape: f32[1,128], index: 6, kind: input, shape index: {}]
  %s7 = inlined_call_operand.hbm [shape: bf16[128,128], index: 7, kind: input, shape index: {}]
  %s8 = inlined_call_operand.vmem [shape: f32[1,128], index: 8, kind: input, shape index: {}]
  %s9 = inlined_call_operand.hbm [shape: f32[16,128], index: 9, kind: output, shape index: {}]
  %s10 = sld [smem:[#allocation0]]
  $region66: #{tpu_custom_call.1} parent=0
    _
  %s12 = ssub.s32 1, %s10
  %s13 = scalar_select 0, %s12, %s10
  $region1: #{tpu_custom_call.1} parent=0
    #allocation2 [shape = 'u8[8192]{0}', space=vmem, size = 0x2000, scoped, tag = 'input window, operand 0, single buffered']
    #allocation3 [shape = 's32[1]{0}', space=sflag, size = 0x4, scoped, tag = 'scoped memory for tpu_custom_call.1']
    #allocation4 [shape = 's32[1]{0}', space=sflag, size = 0x4, scoped, tag = 'scoped memory for tpu_custom_call.1']
    #allocation5 [shape = 'u8[4096]{0}', space=vmem, size = 0x1000, scoped, tag = 'input window, operand 1, single buffered']
    #allocation6 [shape = 's32[1]{0}', space=sflag, size = 0x4, scoped, tag = 'scoped memory for tpu_custom_call.1']
    #allocation7 [shape = 'u8[32768]{0}', space=vmem, size = 0x8000, scoped, tag = 'input window, operand 3, single buffered']
    #allocation8 [shape = 'u8[32768]{0}', space=vmem, size = 0x8000, scoped, tag = 'input window, operand 5, single buffered']
    #allocation9 [shape = 's32[1]{0}', space=sflag, size = 0x4, scoped, tag = 'scoped memory for tpu_custom_call.1']
    #allocation10 [shape = 'u8[32768]{0}', space=vmem, size = 0x8000, scoped, tag = 'input window, operand 7, single buffered']
    #allocation11 [shape = 'u8[8192]{0}', space=vmem, size = 0x2000, scoped, tag = 'output window, operand 0, single buffered']
    %14 = vsyncpa [#allocation3], 0
    %15 = vsyncpa [#allocation6], 0
    %16 = vsyncpa [#allocation9], 0
    %17 = vsyncpa [#allocation4], 0
    // Predicated region
    $region2: #{tpu_custom_call.1} parent=1 // pred_check
      _
    $region3: #{tpu_custom_call.1} parent=1 // pred_check_branch
      %19 = sbr.rel (0) target = $region5
    $region4: #{tpu_custom_call.1} parent=1 // pred_region
      %s21 = ssub.s32 256, 256
      %22 = vsyncadd [#allocation3], %s21
      %s23 = sshll.u32 [#allocation2], 4
      %s24 = int_to_ptr.vmem [resolvable:$true] %s23
      %29 = dma.hbm_to_vmem [thread:$0]  %s0, 256, %s24, [#allocation3], 128, 128, 8
    $region5: #{tpu_custom_call.1} parent=1 // pred_fallthru
      _
    // Predicated region
    $region6: #{tpu_custom_call.1} parent=1 // pred_check
      _
    $region7: #{tpu_custom_call.1} parent=1 // pred_check_branch
      %31 = sbr.rel (0) target = $region9
    $region8: #{tpu_custom_call.1} parent=1 // pred_region
      %s33 = ssub.s32 128, 128
      %34 = vsyncadd [#allocation6], %s33
      %s35 = sshll.u32 [#allocation5], 4
      %s36 = int_to_ptr.vmem [resolvable:$true] %s35
      %41 = dma.hbm_to_vmem [thread:$0]  %s1, 128, %s36, [#allocation6], 64, 64, 4
    $region9: #{tpu_custom_call.1} parent=1 // pred_fallthru
      _
    // Predicated region
    $region10: #{tpu_custom_call.1} parent=1 // pred_check
      _
    $region11: #{tpu_custom_call.1} parent=1 // pred_check_branch
      %43 = sbr.rel (0) target = $region13
    $region12: #{tpu_custom_call.1} parent=1 // pred_region
      _
    $region13: #{tpu_custom_call.1} parent=1 // pred_fallthru
      _
    // Predicated region
    $region14: #{tpu_custom_call.1} parent=1 // pred_check
      _
    $region15: #{tpu_custom_call.1} parent=1 // pred_check_branch
      %45 = sbr.rel (0) target = $region17
    $region16: #{tpu_custom_call.1} parent=1 // pred_region
      %s47 = ssub.s32 1024, 1024
      %48 = vsyncadd [#allocation6], %s47
      %s49 = sshll.u32 [#allocation7], 4
      %s50 = int_to_ptr.vmem [resolvable:$true] %s49
      %55 = dma.hbm_to_vmem [thread:$0]  %s3, 1024, %s50, [#allocation6], 64, 64, 4
    $region17: #{tpu_custom_call.1} parent=1 // pred_fallthru
      _
    // Predicated region
    $region18: #{tpu_custom_call.1} parent=1 // pred_check
      _
    $region19: #{tpu_custom_call.1} parent=1 // pred_check_branch
      %57 = sbr.rel (0) target = $region21
    $region20: #{tpu_custom_call.1} parent=1 // pred_region
      _
    $region21: #{tpu_custom_call.1} parent=1 // pred_fallthru
      _
    // Predicated region
    $region22: #{tpu_custom_call.1} parent=1 // pred_check
      _
    $region23: #{tpu_custom_call.1} parent=1 // pred_check_branch
      %59 = sbr.rel (0) target = $region25
    $region24: #{tpu_custom_call.1} parent=1 // pred_region
      %s61 = ssub.s32 1024, 1024
      %62 = vsyncadd [#allocation9], %s61
      %s63 = sshll.u32 [#allocation8], 4
      %s64 = int_to_ptr.vmem [resolvable:$true] %s63
      %69 = dma.hbm_to_vmem [thread:$0]  %s5, 1024, %s64, [#allocation9], 64, 64, 4
    $region25: #{tpu_custom_call.1} parent=1 // pred_fallthru
      _
    // Predicated region
    $region26: #{tpu_custom_call.1} parent=1 // pred_check
      _
    $region27: #{tpu_custom_call.1} parent=1 // pred_check_branch
      %71 = sbr.rel (0) target = $region29
    $region28: #{tpu_custom_call.1} parent=1 // pred_region
      _
    $region29: #{tpu_custom_call.1} parent=1 // pred_fallthru
      _
    // Predicated region
    $region30: #{tpu_custom_call.1} parent=1 // pred_check
      _
    $region31: #{tpu_custom_call.1} parent=1 // pred_check_branch
      %73 = sbr.rel (0) target = $region33
    $region32: #{tpu_custom_call.1} parent=1 // pred_region
      %s75 = ssub.s32 1024, 1024
      %76 = vsyncadd [#allocation9], %s75
      %s77 = sshll.u32 [#allocation10], 4
      %s78 = int_to_ptr.vmem [resolvable:$true] %s77
      %83 = dma.hbm_to_vmem [thread:$0]  %s7, 1024, %s78, [#allocation9], 64, 64, 4
    $region33: #{tpu_custom_call.1} parent=1 // pred_fallthru
      _
    // Predicated region
    $region34: #{tpu_custom_call.1} parent=1 // pred_check
      _
    $region35: #{tpu_custom_call.1} parent=1 // pred_check_branch
      %85 = sbr.rel (0) target = $region37
    $region36: #{tpu_custom_call.1} parent=1 // pred_region
      _
    $region37: #{tpu_custom_call.1} parent=1 // pred_fallthru
      _
    // Predicated region
    $region38: #{tpu_custom_call.1} parent=1 // pred_check
      _
    $region39: #{tpu_custom_call.1} parent=1 // pred_check_branch
      %87 = sbr.rel (0) target = $region41
    $region40: #{tpu_custom_call.1} parent=1 // pred_region
      %88 = dma.done [#allocation3], 256
    $region41: #{tpu_custom_call.1} parent=1 // pred_fallthru
      _
    // Predicated region
    $region42: #{tpu_custom_call.1} parent=1 // pred_check
      _
    $region43: #{tpu_custom_call.1} parent=1 // pred_check_branch
      %90 = sbr.rel (0) target = $region45
    $region44: #{tpu_custom_call.1} parent=1 // pred_region
      %91 = dma.done [#allocation6], 128
    $region45: #{tpu_custom_call.1} parent=1 // pred_fallthru
      _
    // Predicated region
    $region46: #{tpu_custom_call.1} parent=1 // pred_check
      _
    $region47: #{tpu_custom_call.1} parent=1 // pred_check_branch
      %93 = sbr.rel (0) target = $region49
    $region48: #{tpu_custom_call.1} parent=1 // pred_region
      %94 = dma.done [#allocation6], 1024
    $region49: #{tpu_custom_call.1} parent=1 // pred_fallthru
      _
    // Predicated region
    $region50: #{tpu_custom_call.1} parent=1 // pred_check
      _
    $region51: #{tpu_custom_call.1} parent=1 // pred_check_branch
      %96 = sbr.rel (0) target = $region53
    $region52: #{tpu_custom_call.1} parent=1 // pred_region
      %97 = dma.done [#allocation9], 1024
    $region53: #{tpu_custom_call.1} parent=1 // pred_fallthru
      _
    // Predicated region
    $region54: #{tpu_custom_call.1} parent=1 // pred_check
      _
    $region55: #{tpu_custom_call.1} parent=1 // pred_check_branch
      %99 = sbr.rel (0) target = $region57
    $region56: #{tpu_custom_call.1} parent=1 // pred_region
      %100 = dma.done [#allocation9], 1024
    $region57: #{tpu_custom_call.1} parent=1 // pred_fallthru
      _
    %v102 = vld [vmem:[#allocation2] sm:$0xff]
    %v103 = vld [vmem:[#allocation2 + $0x8] sm:$0xff]
    %v104 = vpack.c.bf16 %v103, %v102
    %v105 = vld [vmem:[#allocation5] sm:$0xf]
    %v106 = vld [vmem:[#allocation5 + $0x4] sm:$0xf]
    %v107 = vld [vmem:[%s2] sm:$0x1]
    %v109 = vlaneseq
    %v110 = vshrl.u32 %v109, 7
    %v111 = vsub.s32 0, %v110
    %v112 = vrot.slane %v107, %v111
    %v116 = vunpack.c.l.b16 %v105
    %v117 = vunpack.c.l.b16 %v106
    %v118 = vpack.c.b16 %v117, %v116
    %vm120 = vcmask 130048
    %v122 = vsel %vm120, %v104, 0
    %124 = vmatprep.subr.bf16.mxu0 0
    %125 = vmatpush1.bf16.msra.mxu0 %v118
    %126 = vmatprep.subr.bf16.mxu0 0
    %127 = vmatpush1.bf16.msra.mxu0 0
    %128 = vmatprep.subr.bf16.mxu0 0
    %129 = vmatpush1.bf16.msra.mxu0 0
    %130 = vmatprep.subr.bf16.mxu0 0
    %131 = vmatpush1.bf16.msra.mxu0 0
    %132 = vmatprep.subr.bf16.mxu0 0
    %133 = vmatpush1.bf16.msra.mxu0 0
    %134 = vmatprep.subr.bf16.mxu0 0
    %135 = vmatpush1.bf16.msra.mxu0 0
    %136 = vmatprep.subr.bf16.mxu0 0
    %137 = vmatpush1.bf16.msra.mxu0 0
    %138 = vmatprep.subr.bf16.mxu0 0
    %139 = vmatpush1.bf16.msra.mxu0 0
    %140 = vmatprep.subr.bf16.mxu0 0
    %141 = vmatpush1.bf16.msra.mxu0 0
    %142 = vmatprep.subr.bf16.mxu0 0
    %143 = vmatpush1.bf16.msra.mxu0 0
    %144 = vmatprep.subr.bf16.mxu0 0
    %145 = vmatpush1.bf16.msra.mxu0 0
    %146 = vmatprep.subr.bf16.mxu0 0
    %147 = vmatpush1.bf16.msra.mxu0 0
    %148 = vmatprep.subr.bf16.mxu0 0
    %149 = vmatpush1.bf16.msra.mxu0 0
    %150 = vmatprep.subr.bf16.mxu0 0
    %151 = vmatpush1.bf16.msra.mxu0 0
    %152 = vmatprep.subr.bf16.mxu0 0
    %153 = vmatpush1.bf16.msra.mxu0 0
    %154 = vmatprep.subr.bf16.mxu0 0
    %155 = vmatpush1.bf16.msra.mxu0 0
    %156 = vmatprep.mubr.bf16.mxu0 0
    %157 = vmatmul.mubr.bf16.gmra.mrb[0].mxu0 %v122
    %v158 = vpop.f32.mrb[0].mxu0
    %v159 = vadd.f32 %v112, %v158
    %v160 = vpop.f32.mrb[0].mxu0
    %v161 = vpop.f32.mrb[0].mxu0
    %v162 = vadd.f32 %v112, %v161
    %v163 = vpop.f32.mrb[0].mxu0
    %164 = vdwg.mxu0
    %v165 = vmax.f32 %v159, 0.0
    %v166 = vmax.f32 %v162, 0.0
    %v167 = vpack.c.bf16 %v166, %v165
    %v168 = vld [vmem:[#allocation7] sm:$0xf]
    %v169 = vld [vmem:[#allocation7 + $0x4] sm:$0xf]
    %v170 = vld [vmem:[#allocation7 + $0x8] sm:$0xf]
    %v171 = vld [vmem:[#allocation7 + $0xc] sm:$0xf]
    %v172 = vld [vmem:[#allocation7 + $0x10] sm:$0xf]
    %v173 = vld [vmem:[#allocation7 + $0x14] sm:$0xf]
    %v174 = vld [vmem:[#allocation7 + $0x18] sm:$0xf]
    %v175 = vld [vmem:[#allocation7 + $0x1c] sm:$0xf]
    %v176 = vld [vmem:[#allocation7 + $0x20] sm:$0xf]
    %v177 = vld [vmem:[#allocation7 + $0x24] sm:$0xf]
    %v178 = vld [vmem:[#allocation7 + $0x28] sm:$0xf]
    %v179 = vld [vmem:[#allocation7 + $0x2c] sm:$0xf]
    %v180 = vld [vmem:[#allocation7 + $0x30] sm:$0xf]
    %v181 = vld [vmem:[#allocation7 + $0x34] sm:$0xf]
    %v182 = vld [vmem:[#allocation7 + $0x38] sm:$0xf]
    %v183 = vld [vmem:[#allocation7 + $0x3c] sm:$0xf]
    %v184 = vld [vmem:[%s4] sm:$0x1]
    %v186 = vlaneseq
    %v187 = vshrl.u32 %v186, 7
    %v188 = vsub.s32 0, %v187
    %v189 = vrot.slane %v184, %v188
    %v207 = vunpack.c.l.b16 %v168
    %v208 = vunpack.c.l.b16 %v169
    %v209 = vunpack.c.l.b16 %v170
    %v210 = vunpack.c.l.b16 %v171
    %v211 = vunpack.c.l.b16 %v172
    %v212 = vunpack.c.l.b16 %v173
    %v213 = vunpack.c.l.b16 %v174
    %v214 = vunpack.c.l.b16 %v175
    %v215 = vunpack.c.l.b16 %v176
    %v216 = vunpack.c.l.b16 %v177
    %v217 = vunpack.c.l.b16 %v178
    %v218 = vunpack.c.l.b16 %v179
    %v219 = vunpack.c.l.b16 %v180
    %v220 = vunpack.c.l.b16 %v181
    %v221 = vunpack.c.l.b16 %v182
    %v222 = vunpack.c.l.b16 %v183
    %v223 = vpack.c.b16 %v208, %v207
    %v224 = vpack.c.b16 %v210, %v209
    %v225 = vpack.c.b16 %v212, %v211
    %v226 = vpack.c.b16 %v214, %v213
    %v227 = vpack.c.b16 %v216, %v215
    %v228 = vpack.c.b16 %v218, %v217
    %v229 = vpack.c.b16 %v220, %v219
    %v230 = vpack.c.b16 %v222, %v221
    %239 = vmatprep.subr.bf16.mxu0 0
    %240 = vmatpush1.bf16.msra.mxu0 %v223
    %241 = vmatprep.subr.bf16.mxu0 0
    %242 = vmatpush1.bf16.msra.mxu0 %v224
    %243 = vmatprep.subr.bf16.mxu0 0
    %244 = vmatpush1.bf16.msra.mxu0 %v225
    %245 = vmatprep.subr.bf16.mxu0 0
    %246 = vmatpush1.bf16.msra.mxu0 %v226
    %247 = vmatprep.subr.bf16.mxu0 0
    %248 = vmatpush1.bf16.msra.mxu0 %v227
    %249 = vmatprep.subr.bf16.mxu0 0
    %250 = vmatpush1.bf16.msra.mxu0 %v228
    %251 = vmatprep.subr.bf16.mxu0 0
    %252 = vmatpush1.bf16.msra.mxu0 %v229
    %253 = vmatprep.subr.bf16.mxu0 0
    %254 = vmatpush1.bf16.msra.mxu0 %v230
    %255 = vmatprep.subr.bf16.mxu0 0
    %256 = vmatpush1.bf16.msra.mxu0 0
    %257 = vmatprep.subr.bf16.mxu0 0
    %258 = vmatpush1.bf16.msra.mxu0 0
    %259 = vmatprep.subr.bf16.mxu0 0
    %260 = vmatpush1.bf16.msra.mxu0 0
    %261 = vmatprep.subr.bf16.mxu0 0
    %262 = vmatpush1.bf16.msra.mxu0 0
    %263 = vmatprep.subr.bf16.mxu0 0
    %264 = vmatpush1.bf16.msra.mxu0 0
    %265 = vmatprep.subr.bf16.mxu0 0
    %266 = vmatpush1.bf16.msra.mxu0 0
    %267 = vmatprep.subr.bf16.mxu0 0
    %268 = vmatpush1.bf16.msra.mxu0 0
    %269 = vmatprep.subr.bf16.mxu0 0
    %270 = vmatpush1.bf16.msra.mxu0 0
    %271 = vmatprep.mubr.bf16.mxu0 0
    %272 = vmatmul.mubr.bf16.gmra.mrb[0].mxu0 %v167
    %v273 = vpop.f32.mrb[0].mxu0
    %v274 = vadd.f32 %v189, %v273
    %v275 = vpop.f32.mrb[0].mxu0
    %v276 = vpop.f32.mrb[0].mxu0
    %v277 = vadd.f32 %v189, %v276
    %v278 = vpop.f32.mrb[0].mxu0
    %279 = vdwg.mxu0
    %v280 = vmax.f32 %v274, 0.0
    %v281 = vmax.f32 %v277, 0.0
    %v282 = vpack.c.bf16 %v281, %v280
    %v283 = vld [vmem:[#allocation8] sm:$0xf]
    %v284 = vld [vmem:[#allocation8 + $0x4] sm:$0xf]
    %v285 = vld [vmem:[#allocation8 + $0x8] sm:$0xf]
    %v286 = vld [vmem:[#allocation8 + $0xc] sm:$0xf]
    %v287 = vld [vmem:[#allocation8 + $0x10] sm:$0xf]
    %v288 = vld [vmem:[#allocation8 + $0x14] sm:$0xf]
    %v289 = vld [vmem:[#allocation8 + $0x18] sm:$0xf]
    %v290 = vld [vmem:[#allocation8 + $0x1c] sm:$0xf]
    %v291 = vld [vmem:[#allocation8 + $0x20] sm:$0xf]
    %v292 = vld [vmem:[#allocation8 + $0x24] sm:$0xf]
    %v293 = vld [vmem:[#allocation8 + $0x28] sm:$0xf]
    %v294 = vld [vmem:[#allocation8 + $0x2c] sm:$0xf]
    %v295 = vld [vmem:[#allocation8 + $0x30] sm:$0xf]
    %v296 = vld [vmem:[#allocation8 + $0x34] sm:$0xf]
    %v297 = vld [vmem:[#allocation8 + $0x38] sm:$0xf]
    %v298 = vld [vmem:[#allocation8 + $0x3c] sm:$0xf]
    %v299 = vld [vmem:[%s6] sm:$0x1]
    %v301 = vlaneseq
    %v302 = vshrl.u32 %v301, 7
    %v303 = vsub.s32 0, %v302
    %v304 = vrot.slane %v299, %v303
    %v322 = vunpack.c.l.b16 %v283
    %v323 = vunpack.c.l.b16 %v284
    %v324 = vunpack.c.l.b16 %v285
    %v325 = vunpack.c.l.b16 %v286
    %v326 = vunpack.c.l.b16 %v287
    %v327 = vunpack.c.l.b16 %v288
    %v328 = vunpack.c.l.b16 %v289
    %v329 = vunpack.c.l.b16 %v290
    %v330 = vunpack.c.l.b16 %v291
    %v331 = vunpack.c.l.b16 %v292
    %v332 = vunpack.c.l.b16 %v293
    %v333 = vunpack.c.l.b16 %v294
    %v334 = vunpack.c.l.b16 %v295
    %v335 = vunpack.c.l.b16 %v296
    %v336 = vunpack.c.l.b16 %v297
    %v337 = vunpack.c.l.b16 %v298
    %v338 = vpack.c.b16 %v323, %v322
    %v339 = vpack.c.b16 %v325, %v324
    %v340 = vpack.c.b16 %v327, %v326
    %v341 = vpack.c.b16 %v329, %v328
    %v342 = vpack.c.b16 %v331, %v330
    %v343 = vpack.c.b16 %v333, %v332
    %v344 = vpack.c.b16 %v335, %v334
    %v345 = vpack.c.b16 %v337, %v336
    %354 = vmatprep.subr.bf16.mxu0 0
    %355 = vmatpush1.bf16.msra.mxu0 %v338
    %356 = vmatprep.subr.bf16.mxu0 0
    %357 = vmatpush1.bf16.msra.mxu0 %v339
    %358 = vmatprep.subr.bf16.mxu0 0
    %359 = vmatpush1.bf16.msra.mxu0 %v340
    %360 = vmatprep.subr.bf16.mxu0 0
    %361 = vmatpush1.bf16.msra.mxu0 %v341
    %362 = vmatprep.subr.bf16.mxu0 0
    %363 = vmatpush1.bf16.msra.mxu0 %v342
    %364 = vmatprep.subr.bf16.mxu0 0
    %365 = vmatpush1.bf16.msra.mxu0 %v343
    %366 = vmatprep.subr.bf16.mxu0 0
    %367 = vmatpush1.bf16.msra.mxu0 %v344
    %368 = vmatprep.subr.bf16.mxu0 0
    %369 = vmatpush1.bf16.msra.mxu0 %v345
    %370 = vmatprep.subr.bf16.mxu0 0
    %371 = vmatpush1.bf16.msra.mxu0 0
    %372 = vmatprep.subr.bf16.mxu0 0
    %373 = vmatpush1.bf16.msra.mxu0 0
    %374 = vmatprep.subr.bf16.mxu0 0
    %375 = vmatpush1.bf16.msra.mxu0 0
    %376 = vmatprep.subr.bf16.mxu0 0
    %377 = vmatpush1.bf16.msra.mxu0 0
    %378 = vmatprep.subr.bf16.mxu0 0
    %379 = vmatpush1.bf16.msra.mxu0 0
    %380 = vmatprep.subr.bf16.mxu0 0
    %381 = vmatpush1.bf16.msra.mxu0 0
    %382 = vmatprep.subr.bf16.mxu0 0
    %383 = vmatpush1.bf16.msra.mxu0 0
    %384 = vmatprep.subr.bf16.mxu0 0
    %385 = vmatpush1.bf16.msra.mxu0 0
    %386 = vmatprep.mubr.bf16.mxu0 0
    %387 = vmatmul.mubr.bf16.gmra.mrb[0].mxu0 %v282
    %v388 = vpop.f32.mrb[0].mxu0
    %v389 = vadd.f32 %v304, %v388
    %v390 = vpop.f32.mrb[0].mxu0
    %v391 = vpop.f32.mrb[0].mxu0
    %v392 = vadd.f32 %v304, %v391
    %v393 = vpop.f32.mrb[0].mxu0
    %394 = vdwg.mxu0
    %v395 = vmax.f32 %v389, 0.0
    %v396 = vmax.f32 %v392, 0.0
    %v397 = vpack.c.bf16 %v396, %v395
    %v398 = vld [vmem:[#allocation10] sm:$0xf]
    %v399 = vld [vmem:[#allocation10 + $0x4] sm:$0xf]
    %v400 = vld [vmem:[#allocation10 + $0x8] sm:$0xf]
    %v401 = vld [vmem:[#allocation10 + $0xc] sm:$0xf]
    %v402 = vld [vmem:[#allocation10 + $0x10] sm:$0xf]
    %v403 = vld [vmem:[#allocation10 + $0x14] sm:$0xf]
    %v404 = vld [vmem:[#allocation10 + $0x18] sm:$0xf]
    %v405 = vld [vmem:[#allocation10 + $0x1c] sm:$0xf]
    %v406 = vld [vmem:[#allocation10 + $0x20] sm:$0xf]
    %v407 = vld [vmem:[#allocation10 + $0x24] sm:$0xf]
    %v408 = vld [vmem:[#allocation10 + $0x28] sm:$0xf]
    %v409 = vld [vmem:[#allocation10 + $0x2c] sm:$0xf]
    %v410 = vld [vmem:[#allocation10 + $0x30] sm:$0xf]
    %v411 = vld [vmem:[#allocation10 + $0x34] sm:$0xf]
    %v412 = vld [vmem:[#allocation10 + $0x38] sm:$0xf]
    %v413 = vld [vmem:[#allocation10 + $0x3c] sm:$0xf]
    %v414 = vld [vmem:[%s8] sm:$0x1]
    %v416 = vlaneseq
    %v417 = vshrl.u32 %v416, 7
    %v418 = vsub.s32 0, %v417
    %v419 = vrot.slane %v414, %v418
    %v437 = vunpack.c.l.b16 %v398
    %v438 = vunpack.c.l.b16 %v399
    %v439 = vunpack.c.l.b16 %v400
    %v440 = vunpack.c.l.b16 %v401
    %v441 = vunpack.c.l.b16 %v402
    %v442 = vunpack.c.l.b16 %v403
    %v443 = vunpack.c.l.b16 %v404
    %v444 = vunpack.c.l.b16 %v405
    %v445 = vunpack.c.l.b16 %v406
    %v446 = vunpack.c.l.b16 %v407
    %v447 = vunpack.c.l.b16 %v408
    %v448 = vunpack.c.l.b16 %v409
    %v449 = vunpack.c.l.b16 %v410
    %v450 = vunpack.c.l.b16 %v411
    %v451 = vunpack.c.l.b16 %v412
    %v452 = vunpack.c.l.b16 %v413
    %v453 = vpack.c.b16 %v438, %v437
    %v454 = vpack.c.b16 %v440, %v439
    %v455 = vpack.c.b16 %v442, %v441
    %v456 = vpack.c.b16 %v444, %v443
    %v457 = vpack.c.b16 %v446, %v445
    %v458 = vpack.c.b16 %v448, %v447
    %v459 = vpack.c.b16 %v450, %v449
    %v460 = vpack.c.b16 %v452, %v451
    %469 = vmatprep.subr.bf16.mxu0 0
    %470 = vmatpush1.bf16.msra.mxu0 %v453
    %471 = vmatprep.subr.bf16.mxu0 0
    %472 = vmatpush1.bf16.msra.mxu0 %v454
    %473 = vmatprep.subr.bf16.mxu0 0
    %474 = vmatpush1.bf16.msra.mxu0 %v455
    %475 = vmatprep.subr.bf16.mxu0 0
    %476 = vmatpush1.bf16.msra.mxu0 %v456
    %477 = vmatprep.subr.bf16.mxu0 0
    %478 = vmatpush1.bf16.msra.mxu0 %v457
    %479 = vmatprep.subr.bf16.mxu0 0
    %480 = vmatpush1.bf16.msra.mxu0 %v458
    %481 = vmatprep.subr.bf16.mxu0 0
    %482 = vmatpush1.bf16.msra.mxu0 %v459
    %483 = vmatprep.subr.bf16.mxu0 0
    %484 = vmatpush1.bf16.msra.mxu0 %v460
    %485 = vmatprep.subr.bf16.mxu0 0
    %486 = vmatpush1.bf16.msra.mxu0 0
    %487 = vmatprep.subr.bf16.mxu0 0
    %488 = vmatpush1.bf16.msra.mxu0 0
    %489 = vmatprep.subr.bf16.mxu0 0
    %490 = vmatpush1.bf16.msra.mxu0 0
    %491 = vmatprep.subr.bf16.mxu0 0
    %492 = vmatpush1.bf16.msra.mxu0 0
    %493 = vmatprep.subr.bf16.mxu0 0
    %494 = vmatpush1.bf16.msra.mxu0 0
    %495 = vmatprep.subr.bf16.mxu0 0
    %496 = vmatpush1.bf16.msra.mxu0 0
    %497 = vmatprep.subr.bf16.mxu0 0
    %498 = vmatpush1.bf16.msra.mxu0 0
    %499 = vmatprep.subr.bf16.mxu0 0
    %500 = vmatpush1.bf16.msra.mxu0 0
    %501 = vmatprep.mubr.bf16.mxu0 0
    %502 = vmatmul.mubr.bf16.gmra.mrb[0].mxu0 %v397
    %v503 = vpop.f32.mrb[0].mxu0
    %v504 = vadd.f32 %v419, %v503
    %v505 = vpop.f32.mrb[0].mxu0
    %v506 = vpop.f32.mrb[0].mxu0
    %v507 = vadd.f32 %v419, %v506
    %v508 = vpop.f32.mrb[0].mxu0
    %509 = vdwg.mxu0
    %v510 = vtanh.pop %v504
    %v511 = vtanh.pop %v507
    %512 = vst [vmem:[#allocation11] sm:$0xff] %v510
    %513 = vst [vmem:[#allocation11 + $0x8] sm:$0xff] %v511
    // Predicated region
    $region58: #{tpu_custom_call.1} parent=1 // pred_check
      _
    $region59: #{tpu_custom_call.1} parent=1 // pred_check_branch
      %515 = sbr.rel (0) target = $region61
    $region60: #{tpu_custom_call.1} parent=1 // pred_region
      %s517 = ssub.s32 256, 256
      %518 = vsyncadd [#allocation4], %s517
      %s519 = sshll.u32 [#allocation11], 4
      %s520 = int_to_ptr.vmem [resolvable:$true] %s519
      %525 = dma.vmem_to_hbm [thread:$0]  %s520, 256, %s9, [#allocation4], 128, 128, 8
    $region61: #{tpu_custom_call.1} parent=1 // pred_fallthru
      _
    // Predicated region
    $region62: #{tpu_custom_call.1} parent=1 // pred_check
      _
    $region63: #{tpu_custom_call.1} parent=1 // pred_check_branch
      %527 = sbr.rel (0) target = $region65
    $region64: #{tpu_custom_call.1} parent=1 // pred_region
      %528 = dma.done [#allocation4], 256
    $region65: #{tpu_custom_call.1} parent=1 // pred_fallthru
      _
    %529 = vsyncpa [#allocation3], 1
    %530 = vsyncpa [#allocation6], 1
    %531 = vsyncpa [#allocation9], 1
    %532 = vsyncpa [#allocation4], 1

</llo_original>
